<compile_context>
chip_gen: v7x
topology: tpu7x:2x2x1
jax: 0.10.0
libtpu: 0.0.40
codegen_flags: <defaults>
</compile_context>

<pallas_src>
import functools

import jax
import jax.numpy as jnp
import numpy as np
from jax import lax
from jax.experimental import pallas as pl
from jax.experimental.pallas import tpu as pltpu

# SSD-style config (cfg['variance'] etc.) -- deterministic, in-script.
NUM_CLASSES = 8
OVERLAP_THRESH = 0.5
NEG_POS_RATIO = 3
VARIANCE = (0.1, 0.2)

MAX_IMAGES_PER_STEP = 8          # Bt upper bound (fills the 8 vreg sublanes)
RANK_TILE_BYTES = 4 * 1024 * 1024  # budget for the (Bt, rank_tile, P) temp


def _pick_bt(batch, max_bt=MAX_IMAGES_PER_STEP):
    """Largest divisor of `batch` that is <= max_bt."""
    for bt in range(min(batch, max_bt), 0, -1):
        if batch % bt == 0:
            return bt
    return 1


# --------------------------------------------------------------------------- #
# Kernel 1: matching (Bt images per grid step)
# --------------------------------------------------------------------------- #
def _match_kernel(truths_ref, labels_ref, priors_ref, loc_t_ref, conf_t_ref,
                  *, threshold, variance, num_valid_gt):
    Bt, Gp, _ = truths_ref.shape
    P = priors_ref.shape[1]

    truths = truths_ref[...]          # (Bt, Gp, 4)  corner form
    labels = labels_ref[...]          # (Bt, Gp, 1)  int32
    pri = priors_ref[...]             # (4, P)       center form [cx, cy, w, h]

    cx = pri[0:1, :]                  # (1, P)
    cy = pri[1:2, :]
    pw = pri[2:3, :]
    ph = pri[3:4, :]

    p_xmin = (cx - 0.5 * pw)[None]    # (1, 1, P)
    p_ymin = (cy - 0.5 * ph)[None]
    p_xmax = (cx + 0.5 * pw)[None]
    p_ymax = (cy + 0.5 * ph)[None]

    t_xmin = truths[:, :, 0:1]        # (Bt, Gp, 1)
    t_ymin = truths[:, :, 1:2]
    t_xmax = truths[:, :, 2:3]
    t_ymax = truths[:, :, 3:4]

    # Jaccard / IoU matrix (Bt, Gp, P)
    iw = jnp.maximum(jnp.minimum(t_xmax, p_xmax) - jnp.maximum(t_xmin, p_xmin), 0.0)
    ih = jnp.maximum(jnp.minimum(t_ymax, p_ymax) - jnp.maximum(t_ymin, p_ymin), 0.0)
    inter = iw * ih
    area_t = (t_xmax - t_xmin) * (t_ymax - t_ymin)        # (Bt, Gp, 1)
    area_p = (p_xmax - p_xmin) * (p_ymax - p_ymin)        # (1, 1, P)
    overlaps = inter / (area_t + area_p - inter)          # (Bt, Gp, P)

    g_iota = lax.broadcasted_iota(jnp.int32, (Bt, Gp, P), 1)
    p_iota = lax.broadcasted_iota(jnp.int32, (Bt, Gp, P), 2)

    # mask padded ground-truth rows out of all matching logic
    valid = g_iota < num_valid_gt
    overlaps = jnp.where(valid, overlaps, -1.0)

    # best gt for every prior (first-max over the gt axis)
    bt_overlap = jnp.max(overlaps, axis=1)                              # (Bt, P)
    bt_idx = jnp.min(jnp.where(overlaps >= bt_overlap[:, None, :], g_iota, Gp),
                     axis=1)                                            # (Bt, P)

    # best prior for every gt (first-max over the prior axis)
    bp_overlap = jnp.max(overlaps, axis=2, keepdims=True)               # (Bt, Gp, 1)
    bp_idx = jnp.min(jnp.where(overlaps >= bp_overlap, p_iota, P),
                     axis=2, keepdims=True)                             # (Bt, Gp, 1)

    # force-match each valid gt's best prior (later gt wins, like the torch loop)
    force = (p_iota == bp_idx) & valid                                  # (Bt, Gp, P)
    forced_g = jnp.max(jnp.where(force, g_iota, -1), axis=1)            # (Bt, P)
    bt_overlap = jnp.where(forced_g >= 0, 2.0, bt_overlap)
    bt_idx = jnp.where(forced_g >= 0, forced_g, bt_idx)

    sel = g_iota == bt_idx[:, None, :]                                  # one-hot over Gp

    def gather_g(col):  # col: (Bt, Gp, 1) float -> (Bt, P)
        return jnp.sum(jnp.where(sel, col, 0.0), axis=1)

    m_xmin = gather_g(t_xmin)
    m_ymin = gather_g(t_ymin)
    m_xmax = gather_g(t_xmax)
    m_ymax = gather_g(t_ymax)

    conf = jnp.sum(jnp.where(sel, labels, 0), axis=1) + 1               # (Bt, P) int32
    conf = jnp.where(bt_overlap < threshold, 0, conf)

    v0, v1 = variance
    g_cx = ((m_xmin + m_xmax) * 0.5 - cx) / (v0 * pw)                   # (Bt, P)
    g_cy = ((m_ymin + m_ymax) * 0.5 - cy) / (v0 * ph)
    g_w = jnp.log((m_xmax - m_xmin) / pw) / v1
    g_h = jnp.log((m_ymax - m_ymin) / ph) / v1

    # single coalesced store of the 4 coordinate rows (one vst-heavy write)
    loc_t_ref[...] = jnp.stack([g_cx, g_cy, g_w, g_h], axis=1)          # (Bt, 4, P)
    conf_t_ref[...] = conf[:, None, :]                                  # (Bt, 1, P)


# --------------------------------------------------------------------------- #
# Kernel 2: losses + hard negative mining (per-step partial sums, no carry)
# --------------------------------------------------------------------------- #
def _loss_kernel(loc_p_ref, conf_ref, loc_t_ref, conf_t_ref, out_ref,
                 *, neg_pos_ratio, rank_tile):
    Bt, P, C = conf_ref.shape

    # native-layout conf (Bt, P, C) -> class-major (Bt, C, P) in-kernel
    # (per-image 2-D transposes on the XLU; avoids an extra HBM pass in XLA)
    conf = jnp.stack([conf_ref[i].T for i in range(Bt)], axis=0)        # (Bt, C, P)

    loc_p = loc_p_ref[...]                                              # (Bt, 4, P)
    loc_t = loc_t_ref[...]                                              # (Bt, 4, P)
    conf_t = conf_t_ref[...][:, 0, :]                                   # (Bt, P) int32

    pos = conf_t > 0                                                    # (Bt, P)
    posf = pos.astype(jnp.float32)

    # smooth L1 over positive anchors (sum reduction, beta = 1)
    d = loc_p - loc_t
    ad = jnp.abs(d)
    sl1 = jnp.where(ad < 1.0, 0.5 * ad * ad, ad - 0.5)                  # (Bt, 4, P)
    loss_l = jnp.sum(jnp.sum(sl1, axis=1) * posf)                       # scalar

    # per-anchor confidence loss: log_sum_exp(logits) - logits[target]
    m = jnp.max(conf, axis=1)                                           # (Bt, P)
    lse = jnp.log(jnp.sum(jnp.exp(conf - m[:, None, :]), axis=1)) + m   # (Bt, P)
    c_iota = lax.broadcasted_iota(jnp.int32, (Bt, C, P), 1)
    gathered = jnp.sum(jnp.where(c_iota == conf_t[:, None, :], conf, 0.0),
                       axis=1)                                          # (Bt, P)
    ce = lse - gathered                                                 # (Bt, P)

    # hard negative mining: stable-descending rank of ce (positives zeroed),
    # computed as a *tiled* pairwise count so the peak temporary is
    # (Bt, rank_tile, P) instead of (P, P).
    lc = jnp.where(pos, 0.0, ce)                                        # (Bt, P)
    lc_row = lc[:, None, :]                                             # (Bt, 1, P)
    lc_col = jnp.stack([lc[i:i + 1, :].T for i in range(Bt)], axis=0)   # (Bt, P, 1)

    rank = jnp.zeros((Bt, P), jnp.int32)
    # TODO(synk): at SSD-scale P (~8732) switch this static chunk loop to a
    # lax.fori_loop / threshold-based top-k so trace size and per-chunk
    # temporaries stay bounded on v7x's 64 MiB VMEM.
    for q0 in range(0, P, rank_tile):
        sz = min(rank_tile, P - q0)
        lcq = lc_col[:, q0:q0 + sz, :]                                  # (Bt, sz, 1)
        qi = q0 + lax.broadcasted_iota(jnp.int32, (Bt, sz, P), 1)
        pi = lax.broadcasted_iota(jnp.int32, (Bt, sz, P), 2)
        cond = (lcq > lc_row) | ((lcq == lc_row) & (qi < pi))
        rank = rank + jnp.sum(cond.astype(jnp.int32), axis=1)           # (Bt, P)

    num_pos = jnp.sum(posf, axis=1, keepdims=True)                      # (Bt, 1)
    num_neg = jnp.minimum(neg_pos_ratio * num_pos, float(P - 1))        # (Bt, 1)
    neg = rank.astype(jnp.float32) < num_neg                            # (Bt, P)

    selm = jnp.logical_or(pos, neg)
    loss_c = jnp.sum(jnp.where(selm, ce, 0.0))                          # scalar
    npos = jnp.sum(posf)                                                # scalar

    # pack the three per-step partial sums into one full lane-dense (8,128) tile
    sub = lax.broadcasted_iota(jnp.int32, (1, 8, 128), 1)
    lane = lax.broadcasted_iota(jnp.int32, (1, 8, 128), 2)
    row0 = sub == 0
    w0 = (row0 & (lane == 0)).astype(jnp.float32)
    w1 = (row0 & (lane == 1)).astype(jnp.float32)
    w2 = (row0 & (lane == 2)).astype(jnp.float32)
    out_ref[...] = loss_l * w0 + loss_c * w1 + npos * w2


# --------------------------------------------------------------------------- #
# Wrapper
# --------------------------------------------------------------------------- #
def multibox_loss(loc_data, conf_data, priors, truths, labels,
                  num_classes=NUM_CLASSES, threshold=OVERLAP_THRESH,
                  neg_pos_ratio=NEG_POS_RATIO, variance=VARIANCE):
    B, P, C = conf_data.shape
    G = truths.shape[1]

    bt = _pick_bt(B)
    n_steps = B // bt

    # pad the ground-truth count to a multiple of 8 (fills sublanes of the
    # (G, P) IoU matrix); padded rows are masked inside the match kernel.
    Gp = max(8, ((G + 7) // 8) * 8)
    truths_p = truths.astype(jnp.float32)
    labels_p = labels.reshape(B, G, 1).astype(jnp.int32)
    if Gp != G:
        truths_p = jnp.concatenate(
            [truths_p, jnp.zeros((B, Gp - G, 4), jnp.float32)], axis=1)
        labels_p = jnp.concatenate(
            [labels_p, jnp.zeros((B, Gp - G, 1), jnp.int32)], axis=1)

    priors_t = jnp.transpose(priors, (1, 0)).astype(jnp.float32)        # (4, P)

    match_fn = pl.pallas_call(
        functools.partial(_match_kernel, threshold=threshold,
                          variance=variance, num_valid_gt=G),
        out_shape=(jax.ShapeDtypeStruct((B, 4, P), jnp.float32),
                   jax.ShapeDtypeStruct((B, 1, P), jnp.int32)),
        grid_spec=pltpu.PrefetchScalarGridSpec(
            num_scalar_prefetch=0,
            grid=(n_steps,),
            in_specs=[pl.BlockSpec((bt, Gp, 4), lambda s: (s, 0, 0)),
                      pl.BlockSpec((bt, Gp, 1), lambda s: (s, 0, 0)),
                      pl.BlockSpec((4, P), lambda s: (0, 0))],
            out_specs=[pl.BlockSpec((bt, 4, P), lambda s: (s, 0, 0)),
                       pl.BlockSpec((bt, 1, P), lambda s: (s, 0, 0))]),
        compiler_params=pltpu.CompilerParams(
            dimension_semantics=("parallel",)),
    )
    loc_t, conf_t = match_fn(truths_p, labels_p, priors_t)

    # loc predictions keep a (tiny) wrapper transpose to coordinate-major;
    # conf predictions stay in native [B, P, C] layout (transposed in-kernel).
    loc_data_t = jnp.transpose(loc_data, (0, 2, 1)).astype(jnp.float32)  # (B, 4, P)
    conf_data_f = conf_data.astype(jnp.float32)                          # (B, P, C)

    # rank-tile size chosen so the (bt, rank_tile, P) temp stays within budget
    rank_tile = max(8, min(P, (RANK_TILE_BYTES // (bt * P * 4)) // 8 * 8))

    loss_fn = pl.pallas_call(
        functools.partial(_loss_kernel, neg_pos_ratio=float(neg_pos_ratio),
                          rank_tile=rank_tile),
        out_shape=jax.ShapeDtypeStruct((n_steps, 8, 128), jnp.float32),
        grid_spec=pltpu.PrefetchScalarGridSpec(
            num_scalar_prefetch=0,
            grid=(n_steps,),
            in_specs=[pl.BlockSpec((bt, 4, P), lambda s: (s, 0, 0)),
                      pl.BlockSpec((bt, P, C), lambda s: (s, 0, 0)),
                      pl.BlockSpec((bt, 4, P), lambda s: (s, 0, 0)),
                      pl.BlockSpec((bt, 1, P), lambda s: (s, 0, 0))],
            out_specs=pl.BlockSpec((1, 8, 128), lambda s: (s, 0, 0))),
        compiler_params=pltpu.CompilerParams(
            dimension_semantics=("parallel",)),
    )
    partials = loss_fn(loc_data_t, conf_data_f, loc_t, conf_t)

    sums = jnp.sum(partials, axis=0)                 # (8, 128)
    loss_l_sum = sums[0, 0]
    loss_c_sum = sums[0, 1]
    n_pos = jnp.maximum(sums[0, 2], 1.0)             # guard: no positives
    return loss_l_sum / n_pos, loss_c_sum / n_pos


# --------------------------------------------------------------------------- #
# Pure-JAX reference (same math, no Pallas) for a correctness sanity check
# --------------------------------------------------------------------------- #
def _ref_match(truths_b, labels_b, priors):
    p_pt = jnp.concatenate([priors[:, :2] - priors[:, 2:] / 2,
                            priors[:, :2] + priors[:, 2:] / 2], axis=1)
    ixmin = jnp.maximum(truths_b[:, None, 0], p_pt[None, :, 0])
    iymin = jnp.maximum(truths_b[:, None, 1], p_pt[None, :, 1])
    ixmax = jnp.minimum(truths_b[:, None, 2], p_pt[None, :, 2])
    iymax = jnp.minimum(truths_b[:, None, 3], p_pt[None, :, 3])
    inter = jnp.maximum(ixmax - ixmin, 0.0) * jnp.maximum(iymax - iymin, 0.0)
    area_t = ((truths_b[:, 2] - truths_b[:, 0]) *
              (truths_b[:, 3] - truths_b[:, 1]))[:, None]
    area_p = ((p_pt[:, 2] - p_pt[:, 0]) * (p_pt[:, 3] - p_pt[:, 1]))[None, :]
    ov = inter / (area_t + area_p - inter)
    bt_ov = ov.max(0)
    bt_idx = ov.argmax(0)
    bp_idx = ov.argmax(1)
    bt_ov = bt_ov.at[bp_idx].set(2.0)
    for j in range(truths_b.shape[0]):
        bt_idx = bt_idx.at[bp_idx[j]].set(j)
    matched = truths_b[bt_idx]
    conf = labels_b[bt_idx] + 1
    conf = jnp.where(bt_ov < OVERLAP_THRESH, 0, conf)
    g_cxcy = ((matched[:, :2] + matched[:, 2:]) / 2 - priors[:, :2]) / (VARIANCE[0] * priors[:, 2:])
    g_wh = jnp.log((matched[:, 2:] - matched[:, :2]) / priors[:, 2:]) / VARIANCE[1]
    return jnp.concatenate([g_cxcy, g_wh], axis=1), conf


def _ref_loss(loc_data, conf_data, priors, truths, labels):
    B, P, _ = loc_data.shape
    loss_l = 0.0
    loss_c = 0.0
    n_pos_total = 0.0
    for b in range(B):
        loc_t, conf_t = _ref_match(truths[b], labels[b], priors)
        pos = conf_t > 0
        d = loc_data[b] - loc_t
        ad = jnp.abs(d)
        sl1 = jnp.where(ad < 1.0, 0.5 * ad * ad, ad - 0.5)
        loss_l += jnp.sum(sl1 * pos[:, None].astype(jnp.float32))
        logits = conf_data[b]
        lse = jax.scipy.special.logsumexp(logits, axis=1)
        gathered = jnp.take_along_axis(logits, conf_t[:, None].astype(jnp.int32), axis=1)[:, 0]
        ce = lse - gathered
        lc = jnp.where(pos, 0.0, ce)
        order = jnp.argsort(-lc)          # descending, stable
        rank = jnp.argsort(order)
        num_pos = jnp.sum(pos.astype(jnp.int32))
        num_neg = jnp.minimum(NEG_POS_RATIO * num_pos, P - 1)
        neg = rank < num_neg
        selm = pos | neg
        loss_c += jnp.sum(jnp.where(selm, ce, 0.0))
        n_pos_total += num_pos.astype(jnp.float32)
    n_pos_total = jnp.maximum(n_pos_total, 1.0)
    return loss_l / n_pos_total, loss_c / n_pos_total


# --------------------------------------------------------------------------- #
if __name__ == "__main__":
    B, P, C, G = 2, 128, NUM_CLASSES, 4

    key = jax.random.PRNGKey(0)
    k1, k2, k3, k4, k5, k6, k7 = jax.random.split(key, 7)

    # priors: center-form boxes in [0,1]
    pr_cxcy = jax.random.uniform(k1, (P, 2), minval=0.2, maxval=0.8)
    pr_wh = jax.random.uniform(k2, (P, 2), minval=0.05, maxval=0.4)
    priors = jnp.concatenate([pr_cxcy, pr_wh], axis=1).astype(jnp.float32)

    # ground truth boxes: corner form, G objects per image
    t_cxcy = jax.random.uniform(k3, (B, G, 2), minval=0.25, maxval=0.75)
    t_wh = jax.random.uniform(k4, (B, G, 2), minval=0.1, maxval=0.4)
    truths = jnp.concatenate([t_cxcy - t_wh / 2, t_cxcy + t_wh / 2], axis=2).astype(jnp.float32)
    labels = jax.random.randint(k5, (B, G), 0, C - 1).astype(jnp.int32)  # labels before +1

    # network predictions
    loc_data = (0.1 * jax.random.normal(k6, (B, P, 4))).astype(jnp.float32)
    conf_data = jax.random.normal(k7, (B, P, C)).astype(jnp.float32)

    loss_l, loss_c = multibox_loss(loc_data, conf_data, priors, truths, labels)
    loss_l, loss_c = jax.block_until_ready((loss_l, loss_c))

    ref_l, ref_c = _ref_loss(loc_data, conf_data, priors, truths, labels)
    np.testing.assert_allclose(np.asarray(loss_l), np.asarray(ref_l), rtol=1e-3, atol=1e-4)
    np.testing.assert_allclose(np.asarray(loss_c), np.asarray(ref_c), rtol=1e-3, atol=1e-4)

    print("KERNEL_OK")
</pallas_src>

<mosaic_0001>
module attributes {stable_mosaic.version = 11 : i64} {
  func.func @_match_kernel(%arg0: i32, %arg1: memref<2x8x4xf32, #tpu.memory_space<vmem>>, %arg2: memref<2x8x1xi32, #tpu.memory_space<vmem>>, %arg3: memref<4x128xf32, #tpu.memory_space<vmem>>, %arg4: memref<2x4x128xf32, #tpu.memory_space<vmem>>, %arg5: memref<2x1x128xi32, #tpu.memory_space<vmem>>) attributes {dimension_semantics = [#tpu.dimension_semantics<parallel>], iteration_bounds = array<i64: 1>, scalar_prefetch = 0 : i64, scratch_operands = 0 : i64, tpu.core_type = #tpu.core_type<tc>, window_params = [{transform_indices = @transform_0, window_bounds = array<i64: 2, 8, 4>}, {transform_indices = @transform_1, window_bounds = array<i64: 2, 8, 1>}, {pipeline_mode = #tpu.pipeline_mode<synchronous>, transform_indices = @transform_2, window_bounds = array<i64: 4, 128>}, {transform_indices = @transform_3, window_bounds = array<i64: 2, 4, 128>}, {transform_indices = @transform_4, window_bounds = array<i64: 2, 1, 128>}]} {
    %c0 = arith.constant 0 : index
    %c0_0 = arith.constant 0 : index
    %c0_1 = arith.constant 0 : index
    %0 = vector.load %arg1[%c0, %c0_0, %c0_1] : memref<2x8x4xf32, #tpu.memory_space<vmem>>, vector<2x8x4xf32>
    %c0_2 = arith.constant 0 : index
    %c0_3 = arith.constant 0 : index
    %c0_4 = arith.constant 0 : index
    %1 = vector.load %arg2[%c0_2, %c0_3, %c0_4] : memref<2x8x1xi32, #tpu.memory_space<vmem>>, vector<2x8x1xi32>
    %c0_5 = arith.constant 0 : index
    %c0_6 = arith.constant 0 : index
    %2 = vector.load %arg3[%c0_5, %c0_6] : memref<4x128xf32, #tpu.memory_space<vmem>>, vector<4x128xf32>
    %3 = vector.extract_strided_slice %2 {offsets = [0, 0], sizes = [1, 128], strides = [1, 1]} : vector<4x128xf32> to vector<1x128xf32>
    %4 = vector.extract_strided_slice %2 {offsets = [1, 0], sizes = [1, 128], strides = [1, 1]} : vector<4x128xf32> to vector<1x128xf32>
    %5 = vector.extract_strided_slice %2 {offsets = [2, 0], sizes = [1, 128], strides = [1, 1]} : vector<4x128xf32> to vector<1x128xf32>
    %6 = vector.extract_strided_slice %2 {offsets = [3, 0], sizes = [1, 128], strides = [1, 1]} : vector<4x128xf32> to vector<1x128xf32>
    %cst = arith.constant 5.000000e-01 : f32
    %7 = vector.broadcast %cst : f32 to vector<1x128xf32>
    %8 = arith.mulf %7, %5 : vector<1x128xf32>
    %9 = arith.subf %3, %8 : vector<1x128xf32>
    %10 = vector.shape_cast %9 : vector<1x128xf32> to vector<1x1x128xf32>
    %cst_7 = arith.constant 5.000000e-01 : f32
    %11 = vector.broadcast %cst_7 : f32 to vector<1x128xf32>
    %12 = arith.mulf %11, %6 : vector<1x128xf32>
    %13 = arith.subf %4, %12 : vector<1x128xf32>
    %14 = vector.shape_cast %13 : vector<1x128xf32> to vector<1x1x128xf32>
    %cst_8 = arith.constant 5.000000e-01 : f32
    %15 = vector.broadcast %cst_8 : f32 to vector<1x128xf32>
    %16 = arith.mulf %15, %5 : vector<1x128xf32>
    %17 = arith.addf %3, %16 : vector<1x128xf32>
    %18 = vector.shape_cast %17 : vector<1x128xf32> to vector<1x1x128xf32>
    %cst_9 = arith.constant 5.000000e-01 : f32
    %19 = vector.broadcast %cst_9 : f32 to vector<1x128xf32>
    %20 = arith.mulf %19, %6 : vector<1x128xf32>
    %21 = arith.addf %4, %20 : vector<1x128xf32>
    %22 = vector.shape_cast %21 : vector<1x128xf32> to vector<1x1x128xf32>
    %23 = vector.extract_strided_slice %0 {offsets = [0, 0, 0], sizes = [2, 8, 1], strides = [1, 1, 1]} : vector<2x8x4xf32> to vector<2x8x1xf32>
    %24 = vector.extract_strided_slice %0 {offsets = [0, 0, 1], sizes = [2, 8, 1], strides = [1, 1, 1]} : vector<2x8x4xf32> to vector<2x8x1xf32>
    %25 = vector.extract_strided_slice %0 {offsets = [0, 0, 2], sizes = [2, 8, 1], strides = [1, 1, 1]} : vector<2x8x4xf32> to vector<2x8x1xf32>
    %26 = vector.extract_strided_slice %0 {offsets = [0, 0, 3], sizes = [2, 8, 1], strides = [1, 1, 1]} : vector<2x8x4xf32> to vector<2x8x1xf32>
    %27 = vector.broadcast %25 : vector<2x8x1xf32> to vector<2x8x128xf32>
    %28 = vector.broadcast %18 : vector<1x1x128xf32> to vector<2x8x128xf32>
    %29 = arith.minimumf %27, %28 : vector<2x8x128xf32>
    %30 = vector.broadcast %23 : vector<2x8x1xf32> to vector<2x8x128xf32>
    %31 = vector.broadcast %10 : vector<1x1x128xf32> to vector<2x8x128xf32>
    %32 = arith.maximumf %30, %31 : vector<2x8x128xf32>
    %33 = arith.subf %29, %32 : vector<2x8x128xf32>
    %cst_10 = arith.constant 0.000000e+00 : f32
    %34 = vector.broadcast %cst_10 : f32 to vector<2x8x128xf32>
    %35 = arith.maximumf %33, %34 : vector<2x8x128xf32>
    %36 = vector.broadcast %26 : vector<2x8x1xf32> to vector<2x8x128xf32>
    %37 = vector.broadcast %22 : vector<1x1x128xf32> to vector<2x8x128xf32>
    %38 = arith.minimumf %36, %37 : vector<2x8x128xf32>
    %39 = vector.broadcast %24 : vector<2x8x1xf32> to vector<2x8x128xf32>
    %40 = vector.broadcast %14 : vector<1x1x128xf32> to vector<2x8x128xf32>
    %41 = arith.maximumf %39, %40 : vector<2x8x128xf32>
    %42 = arith.subf %38, %41 : vector<2x8x128xf32>
    %cst_11 = arith.constant 0.000000e+00 : f32
    %43 = vector.broadcast %cst_11 : f32 to vector<2x8x128xf32>
    %44 = arith.maximumf %42, %43 : vector<2x8x128xf32>
    %45 = arith.mulf %35, %44 : vector<2x8x128xf32>
    %46 = arith.subf %25, %23 : vector<2x8x1xf32>
    %47 = arith.subf %26, %24 : vector<2x8x1xf32>
    %48 = arith.mulf %46, %47 : vector<2x8x1xf32>
    %49 = arith.subf %18, %10 : vector<1x1x128xf32>
    %50 = arith.subf %22, %14 : vector<1x1x128xf32>
    %51 = arith.mulf %49, %50 : vector<1x1x128xf32>
    %52 = vector.broadcast %48 : vector<2x8x1xf32> to vector<2x8x128xf32>
    %53 = vector.broadcast %51 : vector<1x1x128xf32> to vector<2x8x128xf32>
    %54 = arith.addf %52, %53 : vector<2x8x128xf32>
    %55 = arith.subf %54, %45 : vector<2x8x128xf32>
    %56 = arith.divf %45, %55 : vector<2x8x128xf32>
    %57 = tpu.iota {dimensions = array<i32: 1>} : vector<2x8x128xi32>
    %58 = tpu.iota {dimensions = array<i32: 2>} : vector<2x8x128xi32>
    %c4_i32 = arith.constant 4 : i32
    %59 = vector.broadcast %c4_i32 : i32 to vector<2x8x128xi32>
    %60 = arith.cmpi slt, %57, %59 : vector<2x8x128xi32>
    %cst_12 = arith.constant -1.000000e+00 : f32
    %61 = vector.broadcast %cst_12 : f32 to vector<2x8x128xf32>
    %62 = arith.select %60, %56, %61 : vector<2x8x128xi1>, vector<2x8x128xf32>
    %cst_13 = arith.constant dense<0xFF800000> : vector<2x128xf32>
    %63 = vector.multi_reduction <maximumf>, %62, %cst_13 [1] : vector<2x8x128xf32> to vector<2x128xf32>
    %64 = vector.shape_cast %63 : vector<2x128xf32> to vector<2x1x128xf32>
    %65 = vector.broadcast %64 : vector<2x1x128xf32> to vector<2x8x128xf32>
    %66 = arith.cmpf oge, %62, %65 : vector<2x8x128xf32>
    %c8_i32 = arith.constant 8 : i32
    %67 = vector.broadcast %c8_i32 : i32 to vector<2x8x128xi32>
    %68 = arith.select %66, %57, %67 : vector<2x8x128xi1>, vector<2x8x128xi32>
    %cst_14 = arith.constant dense<2147483647> : vector<2x128xi32>
    %69 = vector.multi_reduction <minsi>, %68, %cst_14 [1] : vector<2x8x128xi32> to vector<2x128xi32>
    %cst_15 = arith.constant dense<0xFF800000> : vector<2x8xf32>
    %70 = vector.multi_reduction <maximumf>, %62, %cst_15 [2] : vector<2x8x128xf32> to vector<2x8xf32>
    %71 = vector.shape_cast %70 : vector<2x8xf32> to vector<2x8x1xf32>
    %72 = vector.broadcast %71 : vector<2x8x1xf32> to vector<2x8x128xf32>
    %73 = arith.cmpf oge, %62, %72 : vector<2x8x128xf32>
    %c128_i32 = arith.constant 128 : i32
    %74 = vector.broadcast %c128_i32 : i32 to vector<2x8x128xi32>
    %75 = arith.select %73, %58, %74 : vector<2x8x128xi1>, vector<2x8x128xi32>
    %cst_16 = arith.constant dense<2147483647> : vector<2x8xi32>
    %76 = vector.multi_reduction <minsi>, %75, %cst_16 [2] : vector<2x8x128xi32> to vector<2x8xi32>
    %77 = vector.shape_cast %76 : vector<2x8xi32> to vector<2x8x1xi32>
    %78 = vector.broadcast %77 : vector<2x8x1xi32> to vector<2x8x128xi32>
    %79 = arith.cmpi eq, %58, %78 : vector<2x8x128xi32>
    %80 = arith.andi %79, %60 : vector<2x8x128xi1>
    %c-1_i32 = arith.constant -1 : i32
    %81 = vector.broadcast %c-1_i32 : i32 to vector<2x8x128xi32>
    %82 = arith.select %80, %57, %81 : vector<2x8x128xi1>, vector<2x8x128xi32>
    %cst_17 = arith.constant dense<-2147483648> : vector<2x128xi32>
    %83 = vector.multi_reduction <maxsi>, %82, %cst_17 [1] : vector<2x8x128xi32> to vector<2x128xi32>
    %c0_i32 = arith.constant 0 : i32
    %84 = vector.broadcast %c0_i32 : i32 to vector<2x128xi32>
    %85 = arith.cmpi sge, %83, %84 : vector<2x128xi32>
    %cst_18 = arith.constant 2.000000e+00 : f32
    %86 = vector.broadcast %cst_18 : f32 to vector<2x128xf32>
    %87 = arith.select %85, %86, %63 : vector<2x128xi1>, vector<2x128xf32>
    %c0_i32_19 = arith.constant 0 : i32
    %88 = vector.broadcast %c0_i32_19 : i32 to vector<2x128xi32>
    %89 = arith.cmpi sge, %83, %88 : vector<2x128xi32>
    %90 = arith.select %89, %83, %69 : vector<2x128xi1>, vector<2x128xi32>
    %91 = vector.shape_cast %90 : vector<2x128xi32> to vector<2x1x128xi32>
    %92 = vector.broadcast %91 : vector<2x1x128xi32> to vector<2x8x128xi32>
    %93 = arith.cmpi eq, %57, %92 : vector<2x8x128xi32>
    %cst_20 = arith.constant 0.000000e+00 : f32
    %94 = vector.shape_cast %23 : vector<2x8x1xf32> to vector<2x8x1xf32>
    %95 = vector.broadcast %94 : vector<2x8x1xf32> to vector<2x8x128xf32>
    %96 = vector.broadcast %cst_20 : f32 to vector<2x8x128xf32>
    %97 = arith.select %93, %95, %96 : vector<2x8x128xi1>, vector<2x8x128xf32>
    %cst_21 = arith.constant dense<0.000000e+00> : vector<2x128xf32>
    %98 = vector.multi_reduction <add>, %97, %cst_21 [1] : vector<2x8x128xf32> to vector<2x128xf32>
    %cst_22 = arith.constant 0.000000e+00 : f32
    %99 = vector.shape_cast %24 : vector<2x8x1xf32> to vector<2x8x1xf32>
    %100 = vector.broadcast %99 : vector<2x8x1xf32> to vector<2x8x128xf32>
    %101 = vector.broadcast %cst_22 : f32 to vector<2x8x128xf32>
    %102 = arith.select %93, %100, %101 : vector<2x8x128xi1>, vector<2x8x128xf32>
    %cst_23 = arith.constant dense<0.000000e+00> : vector<2x128xf32>
    %103 = vector.multi_reduction <add>, %102, %cst_23 [1] : vector<2x8x128xf32> to vector<2x128xf32>
    %cst_24 = arith.constant 0.000000e+00 : f32
    %104 = vector.shape_cast %25 : vector<2x8x1xf32> to vector<2x8x1xf32>
    %105 = vector.broadcast %104 : vector<2x8x1xf32> to vector<2x8x128xf32>
    %106 = vector.broadcast %cst_24 : f32 to vector<2x8x128xf32>
    %107 = arith.select %93, %105, %106 : vector<2x8x128xi1>, vector<2x8x128xf32>
    %cst_25 = arith.constant dense<0.000000e+00> : vector<2x128xf32>
    %108 = vector.multi_reduction <add>, %107, %cst_25 [1] : vector<2x8x128xf32> to vector<2x128xf32>
    %cst_26 = arith.constant 0.000000e+00 : f32
    %109 = vector.shape_cast %26 : vector<2x8x1xf32> to vector<2x8x1xf32>
    %110 = vector.broadcast %109 : vector<2x8x1xf32> to vector<2x8x128xf32>
    %111 = vector.broadcast %cst_26 : f32 to vector<2x8x128xf32>
    %112 = arith.select %93, %110, %111 : vector<2x8x128xi1>, vector<2x8x128xf32>
    %cst_27 = arith.constant dense<0.000000e+00> : vector<2x128xf32>
    %113 = vector.multi_reduction <add>, %112, %cst_27 [1] : vector<2x8x128xf32> to vector<2x128xf32>
    %c0_i32_28 = arith.constant 0 : i32
    %114 = vector.shape_cast %1 : vector<2x8x1xi32> to vector<2x8x1xi32>
    %115 = vector.broadcast %114 : vector<2x8x1xi32> to vector<2x8x128xi32>
    %116 = vector.broadcast %c0_i32_28 : i32 to vector<2x8x128xi32>
    %117 = arith.select %93, %115, %116 : vector<2x8x128xi1>, vector<2x8x128xi32>
    %cst_29 = arith.constant dense<0> : vector<2x128xi32>
    %118 = vector.multi_reduction <add>, %117, %cst_29 [1] : vector<2x8x128xi32> to vector<2x128xi32>
    %c1_i32 = arith.constant 1 : i32
    %119 = vector.broadcast %c1_i32 : i32 to vector<2x128xi32>
    %120 = arith.addi %118, %119 : vector<2x128xi32>
    %cst_30 = arith.constant 5.000000e-01 : f32
    %121 = vector.broadcast %cst_30 : f32 to vector<2x128xf32>
    %122 = arith.cmpf olt, %87, %121 : vector<2x128xf32>
    %c0_i32_31 = arith.constant 0 : i32
    %123 = vector.broadcast %c0_i32_31 : i32 to vector<2x128xi32>
    %124 = arith.select %122, %123, %120 : vector<2x128xi1>, vector<2x128xi32>
    %125 = arith.addf %98, %108 : vector<2x128xf32>
    %cst_32 = arith.constant 5.000000e-01 : f32
    %126 = vector.broadcast %cst_32 : f32 to vector<2x128xf32>
    %127 = arith.mulf %125, %126 : vector<2x128xf32>
    %128 = vector.broadcast %3 : vector<1x128xf32> to vector<2x128xf32>
    %129 = arith.subf %127, %128 : vector<2x128xf32>
    %cst_33 = arith.constant 1.000000e-01 : f32
    %130 = vector.broadcast %cst_33 : f32 to vector<1x128xf32>
    %131 = arith.mulf %130, %5 : vector<1x128xf32>
    %132 = vector.broadcast %131 : vector<1x128xf32> to vector<2x128xf32>
    %133 = arith.divf %129, %132 : vector<2x128xf32>
    %134 = arith.addf %103, %113 : vector<2x128xf32>
    %cst_34 = arith.constant 5.000000e-01 : f32
    %135 = vector.broadcast %cst_34 : f32 to vector<2x128xf32>
    %136 = arith.mulf %134, %135 : vector<2x128xf32>
    %137 = vector.broadcast %4 : vector<1x128xf32> to vector<2x128xf32>
    %138 = arith.subf %136, %137 : vector<2x128xf32>
    %cst_35 = arith.constant 1.000000e-01 : f32
    %139 = vector.broadcast %cst_35 : f32 to vector<1x128xf32>
    %140 = arith.mulf %139, %6 : vector<1x128xf32>
    %141 = vector.broadcast %140 : vector<1x128xf32> to vector<2x128xf32>
    %142 = arith.divf %138, %141 : vector<2x128xf32>
    %143 = arith.subf %108, %98 : vector<2x128xf32>
    %144 = vector.broadcast %5 : vector<1x128xf32> to vector<2x128xf32>
    %145 = arith.divf %143, %144 : vector<2x128xf32>
    %146 = math.log %145 : vector<2x128xf32>
    %cst_36 = arith.constant 2.000000e-01 : f32
    %147 = vector.broadcast %cst_36 : f32 to vector<2x128xf32>
    %148 = arith.divf %146, %147 : vector<2x128xf32>
    %149 = arith.subf %113, %103 : vector<2x128xf32>
    %150 = vector.broadcast %6 : vector<1x128xf32> to vector<2x128xf32>
    %151 = arith.divf %149, %150 : vector<2x128xf32>
    %152 = math.log %151 : vector<2x128xf32>
    %cst_37 = arith.constant 2.000000e-01 : f32
    %153 = vector.broadcast %cst_37 : f32 to vector<2x128xf32>
    %154 = arith.divf %152, %153 : vector<2x128xf32>
    %155 = vector.shape_cast %133 : vector<2x128xf32> to vector<2x1x128xf32>
    %156 = vector.shape_cast %142 : vector<2x128xf32> to vector<2x1x128xf32>
    %157 = vector.shape_cast %148 : vector<2x128xf32> to vector<2x1x128xf32>
    %158 = vector.shape_cast %154 : vector<2x128xf32> to vector<2x1x128xf32>
    %159 = tpu.concatenate %155, %156, %157, %158 in 1 : vector<2x1x128xf32>, vector<2x1x128xf32>, vector<2x1x128xf32>, vector<2x1x128xf32> -> vector<2x4x128xf32>
    %c0_38 = arith.constant 0 : index
    %c0_39 = arith.constant 0 : index
    %c0_40 = arith.constant 0 : index
    %160 = vector.load %arg4[%c0_38, %c0_39, %c0_40] : memref<2x4x128xf32, #tpu.memory_space<vmem>>, vector<2x4x128xf32>
    tpu.vector_store %arg4[%c0_38, %c0_39, %c0_40], %159 {strides = array<i32>} : memref<2x4x128xf32, #tpu.memory_space<vmem>>, vector<2x4x128xf32>,
    %161 = vector.shape_cast %124 : vector<2x128xi32> to vector<2x1x128xi32>
    %c0_41 = arith.constant 0 : index
    %c0_42 = arith.constant 0 : index
    %c0_43 = arith.constant 0 : index
    %162 = vector.load %arg5[%c0_41, %c0_42, %c0_43] : memref<2x1x128xi32, #tpu.memory_space<vmem>>, vector<2x1x128xi32>
    tpu.vector_store %arg5[%c0_41, %c0_42, %c0_43], %161 {strides = array<i32>} : memref<2x1x128xi32, #tpu.memory_space<vmem>>, vector<2x1x128xi32>,
    return
  }
  func.func @transform_0(%arg0: i32) -> (i32, i32, i32) {
    %c0_i32 = arith.constant 0 : i32
    %c0_i32_0 = arith.constant 0 : i32
    %c0_i32_1 = arith.constant 0 : i32
    return %arg0, %c0_i32, %c0_i32_0 : i32, i32, i32
  }
  func.func @transform_1(%arg0: i32) -> (i32, i32, i32) {
    %c0_i32 = arith.constant 0 : i32
    %c0_i32_0 = arith.constant 0 : i32
    %c0_i32_1 = arith.constant 0 : i32
    return %arg0, %c0_i32, %c0_i32_0 : i32, i32, i32
  }
  func.func @transform_2(%arg0: i32) -> (i32, i32) {
    %c0_i32 = arith.constant 0 : i32
    %c0_i32_0 = arith.constant 0 : i32
    %c0_i32_1 = arith.constant 0 : i32
    return %c0_i32, %c0_i32_0 : i32, i32
  }
  func.func @transform_3(%arg0: i32) -> (i32, i32, i32) {
    %c0_i32 = arith.constant 0 : i32
    %c0_i32_0 = arith.constant 0 : i32
    %c0_i32_1 = arith.constant 0 : i32
    return %arg0, %c0_i32, %c0_i32_0 : i32, i32, i32
  }
  func.func @transform_4(%arg0: i32) -> (i32, i32, i32) {
    %c0_i32 = arith.constant 0 : i32
    %c0_i32_0 = arith.constant 0 : i32
    %c0_i32_1 = arith.constant 0 : i32
    return %arg0, %c0_i32, %c0_i32_0 : i32, i32, i32
  }
}

</mosaic_0001>

<llo_original>
// kernel: tpu_custom_call.1
$region0: #{tpu_custom_call.1}
  #allocation0 [shape = 'u32[]', space=smem, size = 0x4, offset = 0x4, fixed_abs, tag = 'smem constant byte address 0x4 - core index']
  #allocation1 [shape = 'u32[144,128]{1,0:T(1,128)}', space=vmem, size = 0x12000, scoped, tag = 'internal scratch']
  %s0 = inlined_call_operand.vmem [shape: f32[2,8,4], index: 0, kind: input, shape index: {}]
  %s1 = inlined_call_operand.vmem [shape: s32[2,8,1], index: 1, kind: input, shape index: {}]
  %s2 = inlined_call_operand.vmem [shape: f32[4,128], index: 2, kind: input, shape index: {}]
  %s3 = inlined_call_operand.hbm [shape: f32[2,4,128], index: 3, kind: output, shape index: {0}]
  %s4 = inlined_call_operand.hbm [shape: s32[2,1,128], index: 4, kind: output, shape index: {1}]
  %5 = xla_tuple %s3, %s4
  %s6 = sld [smem:[#allocation0]]
  $region30: #{tpu_custom_call.1} parent=0
    _
  %s8 = ssub.s32 1, %s6
  %s9 = scalar_select 0, %s8, %s6
  $region1: #{tpu_custom_call.1} parent=0
    #allocation2 [shape = 'u8[4096]{0}', space=vmem, size = 0x1000, scoped, tag = 'output window, operand 0, single buffered']
    #allocation3 [shape = 's32[1]{0}', space=sflag, size = 0x4, scoped, tag = 'scoped memory for tpu_custom_call.1']
    #allocation4 [shape = 'u8[1024]{0}', space=vmem, size = 0x400, scoped, tag = 'output window, operand 1, single buffered']
    #allocation5 [shape = 's32[1]{0}', space=sflag, size = 0x4, scoped, tag = 'scoped memory for tpu_custom_call.1']
    %10 = vsyncpa [#allocation3], 0
    %11 = vsyncpa [#allocation5], 0
    // Predicated region
    $region2: #{tpu_custom_call.1} parent=1 // pred_check
      _
    $region3: #{tpu_custom_call.1} parent=1 // pred_check_branch
      %13 = sbr.rel (0) target = $region5
    $region4: #{tpu_custom_call.1} parent=1 // pred_region
      _
    $region5: #{tpu_custom_call.1} parent=1 // pred_fallthru
      _
    // Predicated region
    $region6: #{tpu_custom_call.1} parent=1 // pred_check
      _
    $region7: #{tpu_custom_call.1} parent=1 // pred_check_branch
      %15 = sbr.rel (0) target = $region9
    $region8: #{tpu_custom_call.1} parent=1 // pred_region
      _
    $region9: #{tpu_custom_call.1} parent=1 // pred_fallthru
      _
    // Predicated region
    $region10: #{tpu_custom_call.1} parent=1 // pred_check
      _
    $region11: #{tpu_custom_call.1} parent=1 // pred_check_branch
      %17 = sbr.rel (0) target = $region13
    $region12: #{tpu_custom_call.1} parent=1 // pred_region
      _
    $region13: #{tpu_custom_call.1} parent=1 // pred_fallthru
      _
    %v18 = vld [vmem:[%s0] sm:$0xff]
    %v19 = vld [vmem:[%s0 + $0x8] sm:$0xff]
    %v20 = vld [vmem:[%s1] sm:$0xff]
    %v21 = vld [vmem:[%s1 + $0x8] sm:$0xff]
    %v22 = vld [vmem:[%s2] sm:$0xf]
    %v23 = vmul.f32 %v22, 0.5
    %v25 = vrot.slane %v23, 2
    %v27 = vsub.f32 %v22, %v25
    %v28 = vadd.f32 %v22, %v25
    %30 = vset.pattern.permute.xlu0 2
    %31 = vperm.xlu0 %30, %v18
    %v32 = vpop.permute.xlu0 %31
    %35 = vset.pattern.permute.xlu0 2
    %36 = vperm.xlu0 %35, %v19
    %v37 = vpop.permute.xlu0 %36
    %v39 = vlaneseq
    %v40 = vshrl.u32 %v39, 7
    %v41 = vsub.s32 0, %v40
    %v42 = vrot.slane %v28, %v41
    %v43 = vmin.f32 %v32, %v42
    %v44 = vmin.f32 %v37, %v42
    %45 = vset.pattern.permute.xlu0 0
    %46 = vperm.xlu0 %45, %v18
    %v47 = vpop.permute.xlu0 %46
    %49 = vset.pattern.permute.xlu0 0
    %50 = vperm.xlu0 %49, %v19
    %v51 = vpop.permute.xlu0 %50
    %v53 = vlaneseq
    %v54 = vshrl.u32 %v53, 7
    %v55 = vsub.s32 0, %v54
    %v56 = vrot.slane %v27, %v55
    %v57 = vmax.f32 %v47, %v56
    %v58 = vmax.f32 %v51, %v56
    %v59 = vsub.f32 %v43, %v57
    %v60 = vsub.f32 %v44, %v58
    %v61 = vmax.f32 %v59, 0.0
    %v62 = vmax.f32 %v60, 0.0
    %63 = vset.pattern.permute.xlu0 3
    %64 = vperm.xlu0 %63, %v18
    %v65 = vpop.permute.xlu0 %64
    %67 = vset.pattern.permute.xlu0 3
    %68 = vperm.xlu0 %67, %v19
    %v69 = vpop.permute.xlu0 %68
    %v71 = vlaneseq
    %v72 = vshrl.u32 %v71, 7
    %v73 = vsub.s32 1, %v72
    %v74 = vrot.slane %v28, %v73
    %v75 = vmin.f32 %v65, %v74
    %v76 = vmin.f32 %v69, %v74
    %77 = vset.pattern.permute.xlu0 1
    %78 = vperm.xlu0 %77, %v18
    %v79 = vpop.permute.xlu0 %78
    %81 = vset.pattern.permute.xlu0 1
    %82 = vperm.xlu0 %81, %v19
    %v83 = vpop.permute.xlu0 %82
    %v85 = vlaneseq
    %v86 = vshrl.u32 %v85, 7
    %v87 = vsub.s32 1, %v86
    %v88 = vrot.slane %v27, %v87
    %v89 = vmax.f32 %v79, %v88
    %v90 = vmax.f32 %v83, %v88
    %v91 = vsub.f32 %v75, %v89
    %v92 = vsub.f32 %v76, %v90
    %v93 = vmax.f32 %v91, 0.0
    %v94 = vmax.f32 %v92, 0.0
    %v95 = vmul.f32 %v61, %v93
    %v96 = vmul.f32 %v62, %v94
    %97 = vrot.lane.b32.xlu0 %v18, 2
    %v98 = vpop.permute.xlu0 %97
    %99 = vrot.lane.b32.xlu0 %v19, 2
    %v100 = vpop.permute.xlu0 %99
    %v103 = vsub.f32 %v18, %v98
    %v104 = vsub.f32 %v19, %v100
    %107 = vrot.lane.b32.xlu0 %v103, 127
    %v108 = vpop.permute.xlu0 %107
    %109 = vrot.lane.b32.xlu0 %v104, 127
    %v110 = vpop.permute.xlu0 %109
    %v113 = vmul.f32 %v103, %v108
    %v114 = vmul.f32 %v104, %v110
    %v115 = vsub.f32 %v28, %v27
    %v117 = vrot.slane %v115, 1
    %v119 = vmul.f32 %v115, %v117
    %121 = vset.pattern.permute.xlu0 2
    %122 = vperm.xlu0 %121, %v113
    %v123 = vpop.permute.xlu0 %122
    %126 = vset.pattern.permute.xlu0 2
    %127 = vperm.xlu0 %126, %v114
    %v128 = vpop.permute.xlu0 %127
    %v130 = vlaneseq
    %v131 = vshrl.u32 %v130, 7
    %v132 = vsub.s32 0, %v131
    %v133 = vrot.slane %v119, %v132
    %v134 = vadd.f32 %v123, %v133
    %v135 = vadd.f32 %v128, %v133
    %v136 = vsub.f32 %v134, %v95
    %v137 = vsub.f32 %v135, %v96
    %v138 = vrcp.pop %v136
    %v139 = vmul.f32 %v95, %v138
    %v140 = vrcp.pop %v137
    %v141 = vmul.f32 %v96, %v140
    %v142 = vlaneseq
    %v143 = vshrl.u32 %v142, 7
    %v144 = vlaneseq
    %v145 = vand.u32 %v144, 127
    %vm146 = vcmp.lt.s32.totalorder %v143, 4
    %v147 = vsel %vm146, %v139, -1.0
    %v148 = vsel %vm146, %v141, -1.0
    %v149 = vrot.slane %v147, 4
    %v150 = vmax.f32 %v147, %v149
    %v151 = vrot.slane %v150, 2
    %v152 = vmax.f32 %v150, %v151
    %v153 = vrot.slane %v152, 1
    %v154 = vmax.f32 %v152, %v153
    %v155 = vrot.slane %v148, 4
    %v156 = vmax.f32 %v148, %v155
    %v157 = vrot.slane %v156, 2
    %v158 = vmax.f32 %v156, %v157
    %v159 = vrot.slane %v158, 1
    %v160 = vmax.f32 %v158, %v159
    %vm161 = vcmp.ge.f32.partialorder %v147, %v154
    %vm162 = vcmp.ge.f32.partialorder %v148, %v160
    %v163 = vsel %vm161, %v143, 8
    %v164 = vsel %vm162, %v143, 8
    %v165 = vrot.slane %v163, 4
    %vm166 = vcmp.lt.s32.totalorder %v163, %v165
    %v167 = vsel %vm166, %v163, %v165
    %v168 = vrot.slane %v167, 2
    %vm169 = vcmp.lt.s32.totalorder %v167, %v168
    %v170 = vsel %vm169, %v167, %v168
    %v171 = vrot.slane %v170, 1
    %vm172 = vcmp.lt.s32.totalorder %v170, %v171
    %v173 = vsel %vm172, %v170, %v171
    %v174 = vrot.slane %v164, 4
    %vm175 = vcmp.lt.s32.totalorder %v164, %v174
    %v176 = vsel %vm175, %v164, %v174
    %v177 = vrot.slane %v176, 2
    %vm178 = vcmp.lt.s32.totalorder %v176, %v177
    %v179 = vsel %vm178, %v176, %v177
    %v180 = vrot.slane %v179, 1
    %vm181 = vcmp.lt.s32.totalorder %v179, %v180
    %v182 = vsel %vm181, %v179, %v180
    %183 = vmax.xlane.f32.xlu0 %v147
    %v184 = vpop.xlane.xlu0 %183
    %185 = vmax.xlane.f32.xlu0 %v148
    %v186 = vpop.xlane.xlu0 %185
    %vm187 = vcmp.ge.f32.partialorder %v147, %v184
    %vm188 = vcmp.ge.f32.partialorder %v148, %v186
    %v189 = vsel %vm187, %v145, 128
    %v190 = vsel %vm188, %v145, 128
    %v191 = vand.u32 %v189, 65535
    %v192 = vshra.s32 %v189, 16
    %v193 = vcvt.s32.f32 %v191
    %v194 = vcvt.s32.f32 %v192
    %195 = vmin.xlane.f32.xlu0 %v194
    %v196 = vpop.xlane.xlu0 %195
    %vm197 = vcmp.eq.f32.partialorder %v194, %v196
    %v198 = vsel %vm197, %v193, inf
    %199 = vmin.xlane.f32.xlu0 %v198
    %v200 = vpop.xlane.xlu0 %199
    %v201 = vcvt.f32.s32 %v200
    %v202 = vcvt.f32.s32 %v196
    %v203 = vshll.u32 %v202, 16
    %v204 = vadd.s32 %v203, %v201
    %v205 = vand.u32 %v190, 65535
    %v206 = vshra.s32 %v190, 16
    %v207 = vcvt.s32.f32 %v205
    %v208 = vcvt.s32.f32 %v206
    %209 = vmin.xlane.f32.xlu0 %v208
    %v210 = vpop.xlane.xlu0 %209
    %vm211 = vcmp.eq.f32.partialorder %v208, %v210
    %v212 = vsel %vm211, %v207, inf
    %213 = vmin.xlane.f32.xlu0 %v212
    %v214 = vpop.xlane.xlu0 %213
    %v215 = vcvt.f32.s32 %v214
    %v216 = vcvt.f32.s32 %v210
    %v217 = vshll.u32 %v216, 16
    %v218 = vadd.s32 %v217, %v215
    %vm219 = vcmp.eq.s32.totalorder %v145, %v204
    %vm220 = vcmp.eq.s32.totalorder %v145, %v218
    %vm221 = vmand %vm219, %vm146
    %vm222 = vmand %vm220, %vm146
    %v223 = vsel %vm221, %v143, 4294967295
    %v224 = vsel %vm222, %v143, 4294967295
    %v225 = vrot.slane %v223, 4
    %vm226 = vcmp.gt.s32.totalorder %v223, %v225
    %v227 = vsel %vm226, %v223, %v225
    %v228 = vrot.slane %v227, 2
    %vm229 = vcmp.gt.s32.totalorder %v227, %v228
    %v230 = vsel %vm229, %v227, %v228
    %v231 = vrot.slane %v230, 1
    %vm232 = vcmp.gt.s32.totalorder %v230, %v231
    %v233 = vsel %vm232, %v230, %v231
    %v234 = vrot.slane %v224, 4
    %vm235 = vcmp.gt.s32.totalorder %v224, %v234
    %v236 = vsel %vm235, %v224, %v234
    %v237 = vrot.slane %v236, 2
    %vm238 = vcmp.gt.s32.totalorder %v236, %v237
    %v239 = vsel %vm238, %v236, %v237
    %v240 = vrot.slane %v239, 1
    %vm241 = vcmp.gt.s32.totalorder %v239, %v240
    %v242 = vsel %vm241, %v239, %v240
    %vm243 = vcmp.ge.s32.totalorder %v233, 0
    %vm244 = vcmp.ge.s32.totalorder %v242, 0
    %v245 = vsel %vm243, 2.0, %v154
    %v246 = vsel %vm244, 2.0, %v160
    %v247 = vsel %vm243, %v233, %v173
    %v248 = vsel %vm244, %v242, %v182
    %vm249 = vcmp.eq.s32.totalorder %v143, %v247
    %vm250 = vcmp.eq.s32.totalorder %v143, %v248
    %v251 = vsel %vm249, %v47, 0.0
    %v252 = vsel %vm250, %v51, 0.0
    %v253 = vrot.slane %v251, 4
    %v254 = vadd.f32 %v251, %v253
    %v255 = vrot.slane %v254, 2
    %v256 = vadd.f32 %v254, %v255
    %v257 = vrot.slane %v256, 1
    %v258 = vadd.f32 %v256, %v257
    %v259 = vrot.slane %v252, 4
    %v260 = vadd.f32 %v252, %v259
    %v261 = vrot.slane %v260, 2
    %v262 = vadd.f32 %v260, %v261
    %v263 = vrot.slane %v262, 1
    %v264 = vadd.f32 %v262, %v263
    %v265 = vsel %vm249, %v79, 0.0
    %v266 = vsel %vm250, %v83, 0.0
    %v267 = vrot.slane %v265, 4
    %v268 = vadd.f32 %v265, %v267
    %v269 = vrot.slane %v268, 2
    %v270 = vadd.f32 %v268, %v269
    %v271 = vrot.slane %v270, 1
    %v272 = vadd.f32 %v270, %v271
    %v273 = vrot.slane %v266, 4
    %v274 = vadd.f32 %v266, %v273
    %v275 = vrot.slane %v274, 2
    %v276 = vadd.f32 %v274, %v275
    %v277 = vrot.slane %v276, 1
    %v278 = vadd.f32 %v276, %v277
    %v279 = vsel %vm249, %v32, 0.0
    %v280 = vsel %vm250, %v37, 0.0
    %v281 = vrot.slane %v279, 4
    %v282 = vadd.f32 %v279, %v281
    %v283 = vrot.slane %v282, 2
    %v284 = vadd.f32 %v282, %v283
    %v285 = vrot.slane %v284, 1
    %v286 = vadd.f32 %v284, %v285
    %v287 = vrot.slane %v280, 4
    %v288 = vadd.f32 %v280, %v287
    %v289 = vrot.slane %v288, 2
    %v290 = vadd.f32 %v288, %v289
    %v291 = vrot.slane %v290, 1
    %v292 = vadd.f32 %v290, %v291
    %v293 = vsel %vm249, %v65, 0.0
    %v294 = vsel %vm250, %v69, 0.0
    %v295 = vrot.slane %v293, 4
    %v296 = vadd.f32 %v293, %v295
    %v297 = vrot.slane %v296, 2
    %v298 = vadd.f32 %v296, %v297
    %v299 = vrot.slane %v298, 1
    %v300 = vadd.f32 %v298, %v299
    %v301 = vrot.slane %v294, 4
    %v302 = vadd.f32 %v294, %v301
    %v303 = vrot.slane %v302, 2
    %v304 = vadd.f32 %v302, %v303
    %v305 = vrot.slane %v304, 1
    %v306 = vadd.f32 %v304, %v305
    %307 = vset.pattern.permute.xlu0 0
    %308 = vperm.xlu0 %307, %v20
    %v309 = vpop.permute.xlu0 %308
    %310 = vset.pattern.permute.xlu0 0
    %311 = vperm.xlu0 %310, %v21
    %v312 = vpop.permute.xlu0 %311
    %v313 = vsel %vm249, %v309, 0
    %v314 = vsel %vm250, %v312, 0
    %v315 = vrot.slane %v313, 4
    %v316 = vadd.s32 %v313, %v315
    %v317 = vrot.slane %v316, 2
    %v318 = vadd.s32 %v316, %v317
    %v319 = vrot.slane %v318, 1
    %v320 = vadd.s32 %v318, %v319
    %v321 = vrot.slane %v314, 4
    %v322 = vadd.s32 %v314, %v321
    %v323 = vrot.slane %v322, 2
    %v324 = vadd.s32 %v322, %v323
    %v325 = vrot.slane %v324, 1
    %v326 = vadd.s32 %v324, %v325
    %v327 = vadd.s32 %v320, 1
    %v328 = vadd.s32 %v326, 1
    %vm329 = vcmp.lt.f32.partialorder %v245, 0.5
    %vm330 = vcmp.lt.f32.partialorder %v246, 0.5
    %v331 = vsel %vm329, 0, %v327
    %v332 = vsel %vm330, 0, %v328
    %v333 = vadd.f32 %v258, %v286
    %v334 = vadd.f32 %v264, %v292
    %v335 = vmul.f32 %v333, 0.5
    %v336 = vmul.f32 %v334, 0.5
    %v337 = vlaneseq
    %v338 = vshrl.u32 %v337, 7
    %v339 = vsub.s32 0, %v338
    %v340 = vrot.slane %v22, %v339
    %v341 = vsub.f32 %v335, %v340
    %v342 = vsub.f32 %v336, %v340
    %v343 = vmul.f32 %v22, 0.1
    %v344 = vlaneseq
    %v345 = vshrl.u32 %v344, 7
    %v346 = vsub.s32 2, %v345
    %v347 = vrot.slane %v343, %v346
    %v348 = vrcp.pop %v347
    %v349 = vmul.f32 %v341, %v348
    %v350 = vmul.f32 %v342, %v348
    %v351 = vadd.f32 %v272, %v300
    %v352 = vadd.f32 %v278, %v306
    %v353 = vmul.f32 %v351, 0.5
    %v354 = vmul.f32 %v352, 0.5
    %v355 = vlaneseq
    %v356 = vshrl.u32 %v355, 7
    %v357 = vsub.s32 1, %v356
    %v358 = vrot.slane %v22, %v357
    %v359 = vsub.f32 %v353, %v358
    %v360 = vsub.f32 %v354, %v358
    %v361 = vlaneseq
    %v362 = vshrl.u32 %v361, 7
    %v363 = vsub.s32 3, %v362
    %v364 = vrot.slane %v343, %v363
    %v365 = vrcp.pop %v364
    %v366 = vmul.f32 %v359, %v365
    %v367 = vmul.f32 %v360, %v365
    %v368 = vsub.f32 %v286, %v258
    %v369 = vsub.f32 %v292, %v264
    %v370 = vlaneseq
    %v371 = vshrl.u32 %v370, 7
    %v372 = vsub.s32 2, %v371
    %v373 = vrot.slane %v22, %v372
    %v374 = vrcp.pop %v373
    %v375 = vmul.f32 %v368, %v374
    %v376 = vmul.f32 %v369, %v374
    %v377 = vlog2.pop %v375
    %v378 = vmul.f32 %v377, 0.6931472
    %v379 = vlog2.pop %v376
    %v380 = vmul.f32 %v379, 0.6931472
    %v381 = vrcp.pop 0.2
    %v382 = vmul.f32 %v378, %v381
    %v383 = vmul.f32 %v380, %v381
    %v384 = vsub.f32 %v300, %v272
    %v385 = vsub.f32 %v306, %v278
    %v386 = vlaneseq
    %v387 = vshrl.u32 %v386, 7
    %v388 = vsub.s32 3, %v387
    %v389 = vrot.slane %v22, %v388
    %v390 = vrcp.pop %v389
    %v391 = vmul.f32 %v384, %v390
    %v392 = vmul.f32 %v385, %v390
    %v393 = vlog2.pop %v391
    %v394 = vmul.f32 %v393, 0.6931472
    %v395 = vlog2.pop %v392
    %v396 = vmul.f32 %v395, 0.6931472
    %v397 = vmul.f32 %v394, %v381
    %v398 = vmul.f32 %v396, %v381
    %v401 = vrot.slane %v366, 7
    %v402 = vrot.slane %v367, 7
    %v407 = vrot.slane %v382, 6
    %v408 = vrot.slane %v383, 6
    %v413 = vrot.slane %v397, 5
    %v414 = vrot.slane %v398, 5
    %vm417 = vcmask 1040384
    %v418 = vsel %vm417, %v349, %v401
    %v419 = vsel %vm417, %v350, %v402
    %vm420 = vcmask 1041408
    %v421 = vsel %vm420, %v418, %v407
    %v422 = vsel %vm420, %v419, %v408
    %vm423 = vcmask 1042432
    %v424 = vsel %vm423, %v421, %v413
    %v425 = vsel %vm423, %v422, %v414
    %426 = vst [vmem:[#allocation2] sm:$0xf] %v424
    %427 = vst [vmem:[#allocation2 + $0x4] sm:$0xf] %v425
    %428 = vst [vmem:[#allocation4] sm:$0x1] %v331
    %429 = vst [vmem:[#allocation4 + $0x1] sm:$0x1] %v332
    // Predicated region
    $region14: #{tpu_custom_call.1} parent=1 // pred_check
      _
    $region15: #{tpu_custom_call.1} parent=1 // pred_check_branch
      %431 = sbr.rel (0) target = $region17
    $region16: #{tpu_custom_call.1} parent=1 // pred_region
      %s433 = ssub.s32 128, 128
      %434 = vsyncadd [#allocation3], %s433
      %s435 = sshll.u32 [#allocation2], 4
      %s436 = int_to_ptr.vmem [resolvable:$true] %s435
      %441 = dma.vmem_to_hbm [thread:$0]  %s436, 128, %s3, [#allocation3], 64, 64, 4
    $region17: #{tpu_custom_call.1} parent=1 // pred_fallthru
      _
    // Predicated region
    $region18: #{tpu_custom_call.1} parent=1 // pred_check
      _
    $region19: #{tpu_custom_call.1} parent=1 // pred_check_branch
      %443 = sbr.rel (0) target = $region21
    $region20: #{tpu_custom_call.1} parent=1 // pred_region
      %s445 = ssub.s32 32, 32
      %446 = vsyncadd [#allocation5], %s445
      %s447 = sshll.u32 [#allocation4], 4
      %s448 = int_to_ptr.vmem [resolvable:$true] %s447
      %453 = dma.vmem_to_hbm [thread:$0]  %s448, 32, %s4, [#allocation5], 16, 16, 1
    $region21: #{tpu_custom_call.1} parent=1 // pred_fallthru
      _
    // Predicated region
    $region22: #{tpu_custom_call.1} parent=1 // pred_check
      _
    $region23: #{tpu_custom_call.1} parent=1 // pred_check_branch
      %455 = sbr.rel (0) target = $region25
    $region24: #{tpu_custom_call.1} parent=1 // pred_region
      %456 = dma.done [#allocation3], 128
    $region25: #{tpu_custom_call.1} parent=1 // pred_fallthru
      _
    // Predicated region
    $region26: #{tpu_custom_call.1} parent=1 // pred_check
      _
    $region27: #{tpu_custom_call.1} parent=1 // pred_check_branch
      %458 = sbr.rel (0) target = $region29
    $region28: #{tpu_custom_call.1} parent=1 // pred_region
      %459 = dma.done [#allocation5], 32
    $region29: #{tpu_custom_call.1} parent=1 // pred_fallthru
      _
    %460 = vsyncpa [#allocation3], 1
    %461 = vsyncpa [#allocation5], 1

</llo_original>
